<compile_context>
chip_gen: v7x
topology: tpu7x:2x2x1
jax: 0.10.0
libtpu: 0.0.40
codegen_flags: <defaults>
</compile_context>

<pallas_src>
import functools

import jax
import jax.numpy as jnp
from jax import lax
from jax.experimental import pallas as pl
from jax.experimental.pallas import tpu as pltpu

EPS = float(jnp.finfo(jnp.float32).tiny)   # np.finfo(np.float32).tiny
BACKGROUND = 0
IGNORE_LABEL = -1
WEIGHT = 1.0

_LANES = 128
_SUBLANES = 8
_BOX_LANES = 4 * _LANES      # 128 boxes * 4 interleaved channels = 512 lanes / row
_CHUNK_ROWS = 64             # inner-loop chunk: (64, 512) f32 temporaries (~128 KiB each)
_MAX_TILE_ROWS = 1024        # per-grid-step DMA block: 1024 x 512 f32 = 2 MiB per box tensor


def _round_up(x, m):
    return (x + m - 1) // m * m


def _iou_loss_kernel(pred_ref, gt_ref, cls_ref, out_ref, *, tot, chunk_rows):
    # pred_ref / gt_ref: [tile_rows, 512] interleaved boxes (f32 or bf16)
    # cls_ref:           [tile_rows, 128] int32 labels (box-major)
    # out_ref:           [1, 3, 8, 512] f32 partial sums (loss, iou, mask)
    tile_rows = pred_ref.shape[0]
    num_chunks = tile_rows // chunk_rows
    base_box = pl.program_id(0) * (tile_rows * _LANES)   # first global box of this tile

    out_ref[...] = jnp.zeros_like(out_ref)

    # --- constants hoisted out of the chunk loop -----------------------------
    # spread[j, 4j] = 1: one exact {0,1} bf16 MXU matmul puts the per-box mask
    # onto lane 4j of the 512-lane interleaved row (zero elsewhere).
    row_ids = lax.broadcasted_iota(jnp.int32, (_LANES, _BOX_LANES), 0)
    col_ids = lax.broadcasted_iota(jnp.int32, (_LANES, _BOX_LANES), 1)
    spread = (col_ids == 4 * row_ids).astype(jnp.bfloat16)
    # local box index within a chunk (row-major over [chunk_rows, 128] boxes)
    local_box = (lax.broadcasted_iota(jnp.int32, (chunk_rows, _LANES), 0) * _LANES
                 + lax.broadcasted_iota(jnp.int32, (chunk_rows, _LANES), 1))

    def chunk_body(c, carry):
        r0 = pl.multiple_of(c * chunk_rows, chunk_rows)
        p = pred_ref[pl.ds(r0, chunk_rows), :].astype(jnp.float32)
        g = gt_ref[pl.ds(r0, chunk_rows), :].astype(jnp.float32)
        cls = cls_ref[pl.ds(r0, chunk_rows), :]

        # foreground AND inside the real (unpadded / in-bounds) box range.
        valid = (base_box + r0 * _LANES + local_box) < tot
        fg = jnp.logical_and(cls != BACKGROUND, cls != IGNORE_LABEL)
        mask_b = jnp.logical_and(fg, valid).astype(jnp.bfloat16)
        # w[r, 4j] = mask of box j (exactly 0.0 or 1.0), 0 elsewhere.
        w = jnp.dot(mask_b, spread, preferred_element_type=jnp.float32)

        # Channel-shifted views: x_s[r, k] = x[r, k + s]  -> at lane 4j these are
        # the t/r/b channels of box j (lane 4j itself holds l).  Rolls ride the
        # XLU slot and hide under the input DMA.
        p1 = pltpu.roll(p, _BOX_LANES - 1, axis=1)
        p2 = pltpu.roll(p, _BOX_LANES - 2, axis=1)
        p3 = pltpu.roll(p, _BOX_LANES - 3, axis=1)
        g1 = pltpu.roll(g, _BOX_LANES - 1, axis=1)
        g2 = pltpu.roll(g, _BOX_LANES - 2, axis=1)
        g3 = pltpu.roll(g, _BOX_LANES - 3, axis=1)

        aog = jnp.abs(g2) * jnp.abs(g3)
        aop = jnp.abs(p2 - p + 1.0) * jnp.abs(p3 - p1 + 1.0)
        iw = jnp.minimum(p2, g2 + g) - jnp.maximum(p, g) + 1.0
        ih = jnp.minimum(p3, g3 + g1) - jnp.maximum(p1, g1) + 1.0
        inter = jnp.maximum(iw, 0.0) * jnp.maximum(ih, 0.0)
        union = aog + aop - inter

        # Guard everything that will be weighted by 0 (off-channel lanes, padded
        # rows, stale rows of a partial last block, background/ignore boxes) so
        # 0 * NaN never reaches the sums.  Real foreground boxes are untouched.
        keep = w > 0.5
        inter = jnp.where(keep, inter, 0.0)
        union = jnp.where(keep, union, 1.0)

        iou_v = jnp.maximum(inter / union, 0.0)
        loss_v = -jnp.log(jnp.maximum(EPS, iou_v))      # SafeLog

        def part(x):   # (chunk_rows, 512) -> (8, 512): pure VPU adds
            return jnp.sum(
                x.reshape(chunk_rows // _SUBLANES, _SUBLANES, _BOX_LANES), axis=0)

        out_ref[0, 0] += part(loss_v * w)
        out_ref[0, 1] += part(iou_v * w)
        out_ref[0, 2] += part(w)
        return carry

    lax.fori_loop(0, num_chunks, chunk_body, 0)


def _boxes_view(x, rows):
    """[B, N, 4] -> [rows, 512] interleaved view.  Zero-copy (pure reshape) when
    B*N == rows*128; otherwise a single fused pad pass (never a transpose)."""
    flat = x.reshape(-1)
    if x.dtype not in (jnp.float32, jnp.bfloat16):
        flat = flat.astype(jnp.float32)
    need = rows * _BOX_LANES
    if flat.shape[0] != need:
        flat = jnp.pad(flat, (0, need - flat.shape[0]))   # pad value guarded in-kernel
    return flat.reshape(rows, _BOX_LANES)


def _cls_view(c, rows):
    flat = c.reshape(-1).astype(jnp.int32)                # native int32: no wraparound
    need = rows * _LANES
    if flat.shape[0] != need:
        flat = jnp.pad(flat, (0, need - flat.shape[0]))   # 0 == background
    return flat.reshape(rows, _LANES)


@functools.partial(jax.jit, static_argnames=("max_tile_rows",))
def iou_loss(pred_data, target_data, cls_data, *, max_tile_rows=_MAX_TILE_ROWS):
    """pred_data, target_data: [B, N, 4]; cls_data: [B, N, 1] integer labels.

    Returns (loss, mean_iou) scalars, matching IOULoss.forward."""
    B, N = pred_data.shape[0], pred_data.shape[1]
    tot = B * N

    rows = max(_round_up(pl.cdiv(tot, _LANES), _SUBLANES), _SUBLANES)
    chunk_rows = min(_CHUNK_ROWS, rows)                   # always a multiple of 8
    if rows <= chunk_rows:
        tile_rows = rows
        chunk_rows = rows
    else:
        # Large DMA blocks, but at least 2 grid steps so both v7x TCs get work.
        tile_rows = min(max_tile_rows, _round_up(pl.cdiv(rows, 2), chunk_rows))
        tile_rows = _round_up(max(tile_rows, chunk_rows), chunk_rows)
    grid = pl.cdiv(rows, tile_rows)

    pred = _boxes_view(pred_data, rows)
    gt = _boxes_view(target_data, rows)
    cls = _cls_view(cls_data, rows)

    partials = pl.pallas_call(
        functools.partial(_iou_loss_kernel, tot=tot, chunk_rows=chunk_rows),
        grid=(grid,),
        in_specs=[
            pl.BlockSpec((tile_rows, _BOX_LANES), lambda g: (g, 0)),
            pl.BlockSpec((tile_rows, _BOX_LANES), lambda g: (g, 0)),
            pl.BlockSpec((tile_rows, _LANES), lambda g: (g, 0)),
        ],
        out_specs=pl.BlockSpec((1, 3, _SUBLANES, _BOX_LANES),
                               lambda g: (g, 0, 0, 0)),
        out_shape=jax.ShapeDtypeStruct((grid, 3, _SUBLANES, _BOX_LANES),
                                       jnp.float32),
        compiler_params=pltpu.CompilerParams(
            dimension_semantics=("parallel",),
            vmem_limit_bytes=32 * 1024 * 1024,
        ),
    )(pred, gt, cls)

    # Fused epilogue: one reduction, one reciprocal shared by both outputs.
    sums = jnp.sum(partials, axis=(0, 2, 3))              # (3,) = loss, iou, mask
    inv = 1.0 / jnp.maximum(sums[2], 1.0)
    loss = sums[0] * inv * WEIGHT
    mean_iou = sums[1] * inv
    return loss, mean_iou


def _reference(pred, gt, cls):
    """Pure-JAX reference mirroring the PyTorch forward."""
    pred = pred.astype(jnp.float32)
    gt = gt.astype(jnp.float32)
    mask = jnp.logical_and(cls[..., 0] != BACKGROUND,
                           cls[..., 0] != IGNORE_LABEL).astype(jnp.float32)
    aog = jnp.abs(gt[:, :, 2]) * jnp.abs(gt[:, :, 3])
    aop = jnp.abs(pred[:, :, 2] - pred[:, :, 0] + 1) * jnp.abs(pred[:, :, 3] - pred[:, :, 1] + 1)
    iw = jnp.minimum(pred[:, :, 2], gt[:, :, 2] + gt[:, :, 0]) - jnp.maximum(pred[:, :, 0], gt[:, :, 0]) + 1
    ih = jnp.minimum(pred[:, :, 3], gt[:, :, 3] + gt[:, :, 1]) - jnp.maximum(pred[:, :, 1], gt[:, :, 1]) + 1
    inter = jnp.maximum(iw, 0.0) * jnp.maximum(ih, 0.0)
    union = aog + aop - inter
    iou_ = jnp.maximum(inter / union, 0.0)
    loss = -jnp.log(jnp.maximum(EPS, iou_))
    msum = jnp.maximum(mask.sum(), 1.0)
    return (loss * mask).sum() / msum * WEIGHT, (iou_ * mask).sum() / msum


if __name__ == "__main__":
    key = jax.random.PRNGKey(0)

    def run_case(case_key, B, N, box_dtype=jnp.float32, **kw):
        k1, k2, k3 = jax.random.split(case_key, 3)
        # pred boxes (l, t, r, b offsets), positive
        pred = jax.random.uniform(k1, (B, N, 4), jnp.float32, minval=0.0, maxval=8.0)
        # gt boxes, positive (keeps union > 0 as in real training data)
        gt = jax.random.uniform(k2, (B, N, 4), jnp.float32, minval=1.0, maxval=8.0)
        pred = pred.astype(box_dtype)
        gt = gt.astype(box_dtype)
        # class labels in {-1 (ignore), 0 (background), 1 (positive)}
        cls = jax.random.randint(k3, (B, N, 1), minval=-1, maxval=2, dtype=jnp.int32)

        loss, miou = iou_loss(pred, gt, cls, **kw)
        jax.block_until_ready((loss, miou))

        ref_loss, ref_iou = _reference(pred, gt, cls)
        assert jnp.allclose(loss, ref_loss, rtol=1e-3, atol=1e-3), (loss, ref_loss)
        assert jnp.allclose(miou, ref_iou, rtol=1e-3, atol=1e-3), (miou, ref_iou)

    k_a, k_b, k_c = jax.random.split(key, 3)
    # Small aligned case (zero-copy path, single tile / single chunk).
    run_case(k_a, B=2, N=512)
    # Aligned multi-step grid (grid=2, exercises megacore-parallel partials),
    # bf16 boxes to exercise the in-kernel upcast path.
    run_case(k_b, B=2, N=8192, box_dtype=jnp.bfloat16)
    # Unaligned size: pad path + partial last grid block (stale-row guarding).
    run_case(k_c, B=2, N=9000)

    print("KERNEL_OK")
</pallas_src>

<mosaic_0001>
module attributes {stable_mosaic.version = 11 : i64} {
  func.func @_iou_loss_kernel(%arg0: i32, %arg1: memref<8x512xf32, #tpu.memory_space<vmem>>, %arg2: memref<8x512xf32, #tpu.memory_space<vmem>>, %arg3: memref<8x128xi32, #tpu.memory_space<vmem>>, %arg4: memref<1x3x8x512xf32, #tpu.memory_space<vmem>>) attributes {dimension_semantics = [#tpu.dimension_semantics<parallel>], iteration_bounds = array<i64: 1>, scalar_prefetch = 0 : i64, scratch_operands = 0 : i64, tpu.core_type = #tpu.core_type<tc>, window_params = [{transform_indices = @transform_0, window_bounds = array<i64: 8, 512>}, {transform_indices = @transform_1, window_bounds = array<i64: 8, 512>}, {transform_indices = @transform_2, window_bounds = array<i64: 8, 128>}, {transform_indices = @transform_3, window_bounds = array<i64: 1, 3, 8, 512>}]} {
    %c1024_i32 = arith.constant 1024 : i32
    %0 = arith.muli %arg0, %c1024_i32 : i32
    %cst = arith.constant 0.000000e+00 : f32
    %1 = vector.broadcast %cst : f32 to vector<1x3x8x512xf32>
    %c0 = arith.constant 0 : index
    %c0_0 = arith.constant 0 : index
    %c0_1 = arith.constant 0 : index
    %c0_2 = arith.constant 0 : index
    %2 = vector.load %arg4[%c0, %c0_0, %c0_1, %c0_2] : memref<1x3x8x512xf32, #tpu.memory_space<vmem>>, vector<1x3x8x512xf32>
    tpu.vector_store %arg4[%c0, %c0_0, %c0_1, %c0_2], %1 {strides = array<i32>} : memref<1x3x8x512xf32, #tpu.memory_space<vmem>>, vector<1x3x8x512xf32>,
    %3 = tpu.iota {dimensions = array<i32: 0>} : vector<128x512xi32>
    %4 = tpu.iota {dimensions = array<i32: 1>} : vector<128x512xi32>
    %c4_i32 = arith.constant 4 : i32
    %5 = vector.broadcast %c4_i32 : i32 to vector<128x512xi32>
    %6 = arith.muli %5, %3 : vector<128x512xi32>
    %7 = arith.cmpi eq, %4, %6 : vector<128x512xi32>
    %8 = arith.extui %7 : vector<128x512xi1> to vector<128x512xi32>
    %9 = arith.sitofp %8 : vector<128x512xi32> to vector<128x512xf32>
    %10 = arith.truncf %9 : vector<128x512xf32> to vector<128x512xbf16>
    %11 = tpu.iota {dimensions = array<i32: 0>} : vector<8x128xi32>
    %c128_i32 = arith.constant 128 : i32
    %12 = vector.broadcast %c128_i32 : i32 to vector<8x128xi32>
    %13 = arith.muli %11, %12 : vector<8x128xi32>
    %14 = tpu.iota {dimensions = array<i32: 1>} : vector<8x128xi32>
    %15 = arith.addi %13, %14 : vector<8x128xi32>
    %c0_i32 = arith.constant 0 : i32
    %c8_i32 = arith.constant 8 : i32
    %16 = arith.muli %c0_i32, %c8_i32 : i32
    %17 = tpu.assume_multiple %16, 8 : i32
    %18 = arith.index_cast %17 : i32 to index
    %c0_3 = arith.constant 0 : index
    %19 = vector.load %arg1[%18, %c0_3] : memref<8x512xf32, #tpu.memory_space<vmem>>, vector<8x512xf32>
    %20 = arith.index_cast %17 : i32 to index
    %c0_4 = arith.constant 0 : index
    %21 = vector.load %arg2[%20, %c0_4] : memref<8x512xf32, #tpu.memory_space<vmem>>, vector<8x512xf32>
    %22 = arith.index_cast %17 : i32 to index
    %c0_5 = arith.constant 0 : index
    %23 = vector.load %arg3[%22, %c0_5] : memref<8x128xi32, #tpu.memory_space<vmem>>, vector<8x128xi32>
    %c128_i32_6 = arith.constant 128 : i32
    %24 = arith.muli %17, %c128_i32_6 : i32
    %25 = arith.addi %0, %24 : i32
    %26 = vector.broadcast %25 : i32 to vector<8x128xi32>
    %27 = arith.addi %26, %15 : vector<8x128xi32>
    %c1024_i32_7 = arith.constant 1024 : i32
    %28 = vector.broadcast %c1024_i32_7 : i32 to vector<8x128xi32>
    %29 = arith.cmpi slt, %27, %28 : vector<8x128xi32>
    %c0_i32_8 = arith.constant 0 : i32
    %30 = vector.broadcast %c0_i32_8 : i32 to vector<8x128xi32>
    %31 = arith.cmpi ne, %23, %30 : vector<8x128xi32>
    %c-1_i32 = arith.constant -1 : i32
    %32 = vector.broadcast %c-1_i32 : i32 to vector<8x128xi32>
    %33 = arith.cmpi ne, %23, %32 : vector<8x128xi32>
    %34 = arith.andi %31, %33 : vector<8x128xi1>
    %35 = arith.andi %34, %29 : vector<8x128xi1>
    %36 = arith.extui %35 : vector<8x128xi1> to vector<8x128xi32>
    %37 = arith.sitofp %36 : vector<8x128xi32> to vector<8x128xf32>
    %38 = arith.truncf %37 : vector<8x128xf32> to vector<8x128xbf16>
    %cst_9 = arith.constant dense<0.000000e+00> : vector<8x512xf32>
    %39 = tpu.matmul %38, %10, %cst_9 {dimension_numbers = #tpu.dot_dimension_numbers<[1], [0], [0], [1], [0, 0, 1, 1], [], []>} : vector<8x128xbf16>, vector<128x512xbf16>, vector<8x512xf32> -> vector<8x512xf32>
    %c511_i32 = arith.constant 511 : i32
    %40 = tpu.dynamic_rotate %19 by %c511_i32 dim 1 : vector<8x512xf32>, i32 -> vector<8x512xf32>
    %c510_i32 = arith.constant 510 : i32
    %41 = tpu.dynamic_rotate %19 by %c510_i32 dim 1 : vector<8x512xf32>, i32 -> vector<8x512xf32>
    %c509_i32 = arith.constant 509 : i32
    %42 = tpu.dynamic_rotate %19 by %c509_i32 dim 1 : vector<8x512xf32>, i32 -> vector<8x512xf32>
    %c511_i32_10 = arith.constant 511 : i32
    %43 = tpu.dynamic_rotate %21 by %c511_i32_10 dim 1 : vector<8x512xf32>, i32 -> vector<8x512xf32>
    %c510_i32_11 = arith.constant 510 : i32
    %44 = tpu.dynamic_rotate %21 by %c510_i32_11 dim 1 : vector<8x512xf32>, i32 -> vector<8x512xf32>
    %c509_i32_12 = arith.constant 509 : i32
    %45 = tpu.dynamic_rotate %21 by %c509_i32_12 dim 1 : vector<8x512xf32>, i32 -> vector<8x512xf32>
    %46 = math.absf %44 : vector<8x512xf32>
    %47 = math.absf %45 : vector<8x512xf32>
    %48 = arith.mulf %46, %47 : vector<8x512xf32>
    %49 = arith.subf %41, %19 : vector<8x512xf32>
    %cst_13 = arith.constant 1.000000e+00 : f32
    %50 = vector.broadcast %cst_13 : f32 to vector<8x512xf32>
    %51 = arith.addf %49, %50 : vector<8x512xf32>
    %52 = math.absf %51 : vector<8x512xf32>
    %53 = arith.subf %42, %40 : vector<8x512xf32>
    %cst_14 = arith.constant 1.000000e+00 : f32
    %54 = vector.broadcast %cst_14 : f32 to vector<8x512xf32>
    %55 = arith.addf %53, %54 : vector<8x512xf32>
    %56 = math.absf %55 : vector<8x512xf32>
    %57 = arith.mulf %52, %56 : vector<8x512xf32>
    %58 = arith.addf %44, %21 : vector<8x512xf32>
    %59 = arith.minimumf %41, %58 : vector<8x512xf32>
    %60 = arith.maximumf %19, %21 : vector<8x512xf32>
    %61 = arith.subf %59, %60 : vector<8x512xf32>
    %cst_15 = arith.constant 1.000000e+00 : f32
    %62 = vector.broadcast %cst_15 : f32 to vector<8x512xf32>
    %63 = arith.addf %61, %62 : vector<8x512xf32>
    %64 = arith.addf %45, %43 : vector<8x512xf32>
    %65 = arith.minimumf %42, %64 : vector<8x512xf32>
    %66 = arith.maximumf %40, %43 : vector<8x512xf32>
    %67 = arith.subf %65, %66 : vector<8x512xf32>
    %cst_16 = arith.constant 1.000000e+00 : f32
    %68 = vector.broadcast %cst_16 : f32 to vector<8x512xf32>
    %69 = arith.addf %67, %68 : vector<8x512xf32>
    %cst_17 = arith.constant 0.000000e+00 : f32
    %70 = vector.broadcast %cst_17 : f32 to vector<8x512xf32>
    %71 = arith.maximumf %63, %70 : vector<8x512xf32>
    %cst_18 = arith.constant 0.000000e+00 : f32
    %72 = vector.broadcast %cst_18 : f32 to vector<8x512xf32>
    %73 = arith.maximumf %69, %72 : vector<8x512xf32>
    %74 = arith.mulf %71, %73 : vector<8x512xf32>
    %75 = arith.addf %48, %57 : vector<8x512xf32>
    %76 = arith.subf %75, %74 : vector<8x512xf32>
    %cst_19 = arith.constant 5.000000e-01 : f32
    %77 = vector.broadcast %cst_19 : f32 to vector<8x512xf32>
    %78 = arith.cmpf ogt, %39, %77 : vector<8x512xf32>
    %cst_20 = arith.constant 0.000000e+00 : f32
    %79 = vector.broadcast %cst_20 : f32 to vector<8x512xf32>
    %80 = arith.select %78, %74, %79 : vector<8x512xi1>, vector<8x512xf32>
    %cst_21 = arith.constant 1.000000e+00 : f32
    %81 = vector.broadcast %cst_21 : f32 to vector<8x512xf32>
    %82 = arith.select %78, %76, %81 : vector<8x512xi1>, vector<8x512xf32>
    %83 = arith.divf %80, %82 : vector<8x512xf32>
    %cst_22 = arith.constant 0.000000e+00 : f32
    %84 = vector.broadcast %cst_22 : f32 to vector<8x512xf32>
    %85 = arith.maximumf %83, %84 : vector<8x512xf32>
    %cst_23 = arith.constant 1.17549435E-38 : f32
    %86 = vector.broadcast %cst_23 : f32 to vector<8x512xf32>
    %87 = arith.maximumf %86, %85 : vector<8x512xf32>
    %88 = math.log %87 : vector<8x512xf32>
    %cst_24 = arith.constant 0.000000e+00 : f32
    %89 = vector.broadcast %cst_24 : f32 to vector<8x512xf32>
    %90 = arith.subf %89, %88 : vector<8x512xf32>
    %c0_25 = arith.constant 0 : index
    %c0_26 = arith.constant 0 : index
    %c0_27 = arith.constant 0 : index
    %c0_28 = arith.constant 0 : index
    %91 = vector.load %arg4[%c0_25, %c0_26, %c0_27, %c0_28] : memref<1x3x8x512xf32, #tpu.memory_space<vmem>>, vector<1x1x8x512xf32>
    %92 = vector.shape_cast %91 : vector<1x1x8x512xf32> to vector<8x512xf32>
    %93 = arith.mulf %90, %39 : vector<8x512xf32>
    %94 = vector.shape_cast %93 : vector<8x512xf32> to vector<1x8x512xf32>
    %cst_29 = arith.constant dense<0.000000e+00> : vector<8x512xf32>
    %95 = vector.multi_reduction <add>, %94, %cst_29 [0] : vector<1x8x512xf32> to vector<8x512xf32>
    %96 = arith.addf %92, %95 : vector<8x512xf32>
    %c0_30 = arith.constant 0 : index
    %c0_31 = arith.constant 0 : index
    %c0_32 = arith.constant 0 : index
    %c0_33 = arith.constant 0 : index
    %97 = vector.load %arg4[%c0_30, %c0_31, %c0_32, %c0_33] : memref<1x3x8x512xf32, #tpu.memory_space<vmem>>, vector<1x1x8x512xf32>
    %98 = vector.shape_cast %97 : vector<1x1x8x512xf32> to vector<8x512xf32>
    %99 = vector.shape_cast %96 : vector<8x512xf32> to vector<1x1x8x512xf32>
    tpu.vector_store %arg4[%c0_30, %c0_31, %c0_32, %c0_33], %99 {strides = array<i32>} : memref<1x3x8x512xf32, #tpu.memory_space<vmem>>, vector<1x1x8x512xf32>,
    %c0_34 = arith.constant 0 : index
    %c1 = arith.constant 1 : index
    %c0_35 = arith.constant 0 : index
    %c0_36 = arith.constant 0 : index
    %100 = vector.load %arg4[%c0_34, %c1, %c0_35, %c0_36] : memref<1x3x8x512xf32, #tpu.memory_space<vmem>>, vector<1x1x8x512xf32>
    %101 = vector.shape_cast %100 : vector<1x1x8x512xf32> to vector<8x512xf32>
    %102 = arith.mulf %85, %39 : vector<8x512xf32>
    %103 = vector.shape_cast %102 : vector<8x512xf32> to vector<1x8x512xf32>
    %cst_37 = arith.constant dense<0.000000e+00> : vector<8x512xf32>
    %104 = vector.multi_reduction <add>, %103, %cst_37 [0] : vector<1x8x512xf32> to vector<8x512xf32>
    %105 = arith.addf %101, %104 : vector<8x512xf32>
    %c0_38 = arith.constant 0 : index
    %c1_39 = arith.constant 1 : index
    %c0_40 = arith.constant 0 : index
    %c0_41 = arith.constant 0 : index
    %106 = vector.load %arg4[%c0_38, %c1_39, %c0_40, %c0_41] : memref<1x3x8x512xf32, #tpu.memory_space<vmem>>, vector<1x1x8x512xf32>
    %107 = vector.shape_cast %106 : vector<1x1x8x512xf32> to vector<8x512xf32>
    %108 = vector.shape_cast %105 : vector<8x512xf32> to vector<1x1x8x512xf32>
    tpu.vector_store %arg4[%c0_38, %c1_39, %c0_40, %c0_41], %108 {strides = array<i32>} : memref<1x3x8x512xf32, #tpu.memory_space<vmem>>, vector<1x1x8x512xf32>,
    %c0_42 = arith.constant 0 : index
    %c2 = arith.constant 2 : index
    %c0_43 = arith.constant 0 : index
    %c0_44 = arith.constant 0 : index
    %109 = vector.load %arg4[%c0_42, %c2, %c0_43, %c0_44] : memref<1x3x8x512xf32, #tpu.memory_space<vmem>>, vector<1x1x8x512xf32>
    %110 = vector.shape_cast %109 : vector<1x1x8x512xf32> to vector<8x512xf32>
    %111 = vector.shape_cast %39 : vector<8x512xf32> to vector<1x8x512xf32>
    %cst_45 = arith.constant dense<0.000000e+00> : vector<8x512xf32>
    %112 = vector.multi_reduction <add>, %111, %cst_45 [0] : vector<1x8x512xf32> to vector<8x512xf32>
    %113 = arith.addf %110, %112 : vector<8x512xf32>
    %c0_46 = arith.constant 0 : index
    %c2_47 = arith.constant 2 : index
    %c0_48 = arith.constant 0 : index
    %c0_49 = arith.constant 0 : index
    %114 = vector.load %arg4[%c0_46, %c2_47, %c0_48, %c0_49] : memref<1x3x8x512xf32, #tpu.memory_space<vmem>>, vector<1x1x8x512xf32>
    %115 = vector.shape_cast %114 : vector<1x1x8x512xf32> to vector<8x512xf32>
    %116 = vector.shape_cast %113 : vector<8x512xf32> to vector<1x1x8x512xf32>
    tpu.vector_store %arg4[%c0_46, %c2_47, %c0_48, %c0_49], %116 {strides = array<i32>} : memref<1x3x8x512xf32, #tpu.memory_space<vmem>>, vector<1x1x8x512xf32>,
    %c1_i32 = arith.constant 1 : i32
    return
  }
  func.func @transform_0(%arg0: i32) -> (i32, i32) {
    %c0_i32 = arith.constant 0 : i32
    %c0_i32_0 = arith.constant 0 : i32
    return %arg0, %c0_i32 : i32, i32
  }
  func.func @transform_1(%arg0: i32) -> (i32, i32) {
    %c0_i32 = arith.constant 0 : i32
    %c0_i32_0 = arith.constant 0 : i32
    return %arg0, %c0_i32 : i32, i32
  }
  func.func @transform_2(%arg0: i32) -> (i32, i32) {
    %c0_i32 = arith.constant 0 : i32
    %c0_i32_0 = arith.constant 0 : i32
    return %arg0, %c0_i32 : i32, i32
  }
  func.func @transform_3(%arg0: i32) -> (i32, i32, i32, i32) {
    %c0_i32 = arith.constant 0 : i32
    %c0_i32_0 = arith.constant 0 : i32
    %c0_i32_1 = arith.constant 0 : i32
    %c0_i32_2 = arith.constant 0 : i32
    return %arg0, %c0_i32, %c0_i32_0, %c0_i32_1 : i32, i32, i32, i32
  }
}

</mosaic_0001>

<llo_original>
// kernel: iou_loss.1
$region0: #{iou_loss.1}
  #allocation0 [shape = 'u32[]', space=smem, size = 0x4, offset = 0x4, fixed_abs, tag = 'smem constant byte address 0x4 - core index']
  #allocation1 [shape = 'u32[144,128]{1,0:T(1,128)}', space=vmem, size = 0x12000, scoped, tag = 'internal scratch']
  %s0 = inlined_call_operand.vmem [shape: f32[8,512], index: 0, kind: input, shape index: {}]
  %s1 = inlined_call_operand.vmem [shape: f32[8,512], index: 1, kind: input, shape index: {}]
  %s2 = inlined_call_operand.vmem [shape: s32[8,128], index: 2, kind: input, shape index: {}]
  %s3 = inlined_call_operand.vmem [shape: f32[1,3,8,512], index: 3, kind: output, shape index: {}]
  %s4 = sld [smem:[#allocation0]]
  $region22: #{iou_loss.1} parent=0
    _
  %s6 = ssub.s32 1, %s4
  %s7 = scalar_select 0, %s6, %s4
  // Predicated region
  $region2: #{iou_loss.1} parent=0 // pred_check
    _
  $region3: #{iou_loss.1} parent=0 // pred_check_branch
    %9 = sbr.rel (0) target = $region5
  $region4: #{iou_loss.1} parent=0 // pred_region
    _
  $region5: #{iou_loss.1} parent=0 // pred_fallthru
    _
  // Predicated region
  $region6: #{iou_loss.1} parent=0 // pred_check
    _
  $region7: #{iou_loss.1} parent=0 // pred_check_branch
    %11 = sbr.rel (0) target = $region9
  $region8: #{iou_loss.1} parent=0 // pred_region
    _
  $region9: #{iou_loss.1} parent=0 // pred_fallthru
    _
  // Predicated region
  $region10: #{iou_loss.1} parent=0 // pred_check
    _
  $region11: #{iou_loss.1} parent=0 // pred_check_branch
    %13 = sbr.rel (0) target = $region13
  $region12: #{iou_loss.1} parent=0 // pred_region
    _
  $region13: #{iou_loss.1} parent=0 // pred_fallthru
    _
  %s15 = smul.u32 0, 1024
  %16 = vst [vmem:[%s3] sm:$0xff] 0.0
  %17 = vst [vmem:[%s3 + $0x8] sm:$0xff] 0.0
  %18 = vst [vmem:[%s3 + $0x10] sm:$0xff] 0.0
  %19 = vst [vmem:[%s3 + $0x18] sm:$0xff] 0.0
  %20 = vst [vmem:[%s3 + $0x20] sm:$0xff] 0.0
  %21 = vst [vmem:[%s3 + $0x28] sm:$0xff] 0.0
  %22 = vst [vmem:[%s3 + $0x30] sm:$0xff] 0.0
  %23 = vst [vmem:[%s3 + $0x38] sm:$0xff] 0.0
  %24 = vst [vmem:[%s3 + $0x40] sm:$0xff] 0.0
  %25 = vst [vmem:[%s3 + $0x48] sm:$0xff] 0.0
  %26 = vst [vmem:[%s3 + $0x50] sm:$0xff] 0.0
  %27 = vst [vmem:[%s3 + $0x58] sm:$0xff] 0.0
  %v28 = vlaneseq
  %v29 = vshrl.u32 %v28, 7
  %v30 = vadd.s32 %v29, 8
  %v31 = vadd.s32 %v29, 16
  %v32 = vadd.s32 %v29, 24
  %v33 = vadd.s32 %v29, 32
  %v34 = vadd.s32 %v29, 40
  %v35 = vadd.s32 %v29, 48
  %v36 = vadd.s32 %v29, 56
  %v37 = vadd.s32 %v29, 64
  %v38 = vadd.s32 %v29, 72
  %v39 = vadd.s32 %v29, 80
  %v40 = vadd.s32 %v29, 88
  %v41 = vadd.s32 %v29, 96
  %v42 = vadd.s32 %v29, 104
  %v43 = vadd.s32 %v29, 112
  %v44 = vadd.s32 %v29, 120
  %v45 = vlaneseq
  %v46 = vand.u32 %v45, 127
  %v47 = vadd.s32 %v46, 128
  %v48 = vadd.s32 %v46, 256
  %v49 = vadd.s32 %v46, 384
  %v50 = vmul.u32 %v29, 4
  %v51 = vmul.u32 %v30, 4
  %v52 = vmul.u32 %v31, 4
  %v53 = vmul.u32 %v32, 4
  %v54 = vmul.u32 %v33, 4
  %v55 = vmul.u32 %v34, 4
  %v56 = vmul.u32 %v35, 4
  %v57 = vmul.u32 %v36, 4
  %v58 = vmul.u32 %v37, 4
  %v59 = vmul.u32 %v38, 4
  %v60 = vmul.u32 %v39, 4
  %v61 = vmul.u32 %v40, 4
  %v62 = vmul.u32 %v41, 4
  %v63 = vmul.u32 %v42, 4
  %v64 = vmul.u32 %v43, 4
  %v65 = vmul.u32 %v44, 4
  %vm66 = vcmp.eq.s32.totalorder %v46, %v50
  %vm67 = vcmp.eq.s32.totalorder %v47, %v50
  %vm68 = vcmp.eq.s32.totalorder %v48, %v50
  %vm69 = vcmp.eq.s32.totalorder %v49, %v50
  %vm70 = vcmp.eq.s32.totalorder %v46, %v51
  %vm71 = vcmp.eq.s32.totalorder %v47, %v51
  %vm72 = vcmp.eq.s32.totalorder %v48, %v51
  %vm73 = vcmp.eq.s32.totalorder %v49, %v51
  %vm74 = vcmp.eq.s32.totalorder %v46, %v52
  %vm75 = vcmp.eq.s32.totalorder %v47, %v52
  %vm76 = vcmp.eq.s32.totalorder %v48, %v52
  %vm77 = vcmp.eq.s32.totalorder %v49, %v52
  %vm78 = vcmp.eq.s32.totalorder %v46, %v53
  %vm79 = vcmp.eq.s32.totalorder %v47, %v53
  %vm80 = vcmp.eq.s32.totalorder %v48, %v53
  %vm81 = vcmp.eq.s32.totalorder %v49, %v53
  %vm82 = vcmp.eq.s32.totalorder %v46, %v54
  %vm83 = vcmp.eq.s32.totalorder %v47, %v54
  %vm84 = vcmp.eq.s32.totalorder %v48, %v54
  %vm85 = vcmp.eq.s32.totalorder %v49, %v54
  %vm86 = vcmp.eq.s32.totalorder %v46, %v55
  %vm87 = vcmp.eq.s32.totalorder %v47, %v55
  %vm88 = vcmp.eq.s32.totalorder %v48, %v55
  %vm89 = vcmp.eq.s32.totalorder %v49, %v55
  %vm90 = vcmp.eq.s32.totalorder %v46, %v56
  %vm91 = vcmp.eq.s32.totalorder %v47, %v56
  %vm92 = vcmp.eq.s32.totalorder %v48, %v56
  %vm93 = vcmp.eq.s32.totalorder %v49, %v56
  %vm94 = vcmp.eq.s32.totalorder %v46, %v57
  %vm95 = vcmp.eq.s32.totalorder %v47, %v57
  %vm96 = vcmp.eq.s32.totalorder %v48, %v57
  %vm97 = vcmp.eq.s32.totalorder %v49, %v57
  %vm98 = vcmp.eq.s32.totalorder %v46, %v58
  %vm99 = vcmp.eq.s32.totalorder %v47, %v58
  %vm100 = vcmp.eq.s32.totalorder %v48, %v58
  %vm101 = vcmp.eq.s32.totalorder %v49, %v58
  %vm102 = vcmp.eq.s32.totalorder %v46, %v59
  %vm103 = vcmp.eq.s32.totalorder %v47, %v59
  %vm104 = vcmp.eq.s32.totalorder %v48, %v59
  %vm105 = vcmp.eq.s32.totalorder %v49, %v59
  %vm106 = vcmp.eq.s32.totalorder %v46, %v60
  %vm107 = vcmp.eq.s32.totalorder %v47, %v60
  %vm108 = vcmp.eq.s32.totalorder %v48, %v60
  %vm109 = vcmp.eq.s32.totalorder %v49, %v60
  %vm110 = vcmp.eq.s32.totalorder %v46, %v61
  %vm111 = vcmp.eq.s32.totalorder %v47, %v61
  %vm112 = vcmp.eq.s32.totalorder %v48, %v61
  %vm113 = vcmp.eq.s32.totalorder %v49, %v61
  %vm114 = vcmp.eq.s32.totalorder %v46, %v62
  %vm115 = vcmp.eq.s32.totalorder %v47, %v62
  %vm116 = vcmp.eq.s32.totalorder %v48, %v62
  %vm117 = vcmp.eq.s32.totalorder %v49, %v62
  %vm118 = vcmp.eq.s32.totalorder %v46, %v63
  %vm119 = vcmp.eq.s32.totalorder %v47, %v63
  %vm120 = vcmp.eq.s32.totalorder %v48, %v63
  %vm121 = vcmp.eq.s32.totalorder %v49, %v63
  %vm122 = vcmp.eq.s32.totalorder %v46, %v64
  %vm123 = vcmp.eq.s32.totalorder %v47, %v64
  %vm124 = vcmp.eq.s32.totalorder %v48, %v64
  %vm125 = vcmp.eq.s32.totalorder %v49, %v64
  %vm126 = vcmp.eq.s32.totalorder %v46, %v65
  %vm127 = vcmp.eq.s32.totalorder %v47, %v65
  %vm128 = vcmp.eq.s32.totalorder %v48, %v65
  %vm129 = vcmp.eq.s32.totalorder %v49, %v65
  %v130 = vsel %vm66, 1, 0
  %v131 = vsel %vm67, 1, 0
  %v132 = vsel %vm68, 1, 0
  %v133 = vsel %vm69, 1, 0
  %v134 = vsel %vm70, 1, 0
  %v135 = vsel %vm71, 1, 0
  %v136 = vsel %vm72, 1, 0
  %v137 = vsel %vm73, 1, 0
  %v138 = vsel %vm74, 1, 0
  %v139 = vsel %vm75, 1, 0
  %v140 = vsel %vm76, 1, 0
  %v141 = vsel %vm77, 1, 0
  %v142 = vsel %vm78, 1, 0
  %v143 = vsel %vm79, 1, 0
  %v144 = vsel %vm80, 1, 0
  %v145 = vsel %vm81, 1, 0
  %v146 = vsel %vm82, 1, 0
  %v147 = vsel %vm83, 1, 0
  %v148 = vsel %vm84, 1, 0
  %v149 = vsel %vm85, 1, 0
  %v150 = vsel %vm86, 1, 0
  %v151 = vsel %vm87, 1, 0
  %v152 = vsel %vm88, 1, 0
  %v153 = vsel %vm89, 1, 0
  %v154 = vsel %vm90, 1, 0
  %v155 = vsel %vm91, 1, 0
  %v156 = vsel %vm92, 1, 0
  %v157 = vsel %vm93, 1, 0
  %v158 = vsel %vm94, 1, 0
  %v159 = vsel %vm95, 1, 0
  %v160 = vsel %vm96, 1, 0
  %v161 = vsel %vm97, 1, 0
  %v162 = vsel %vm98, 1, 0
  %v163 = vsel %vm99, 1, 0
  %v164 = vsel %vm100, 1, 0
  %v165 = vsel %vm101, 1, 0
  %v166 = vsel %vm102, 1, 0
  %v167 = vsel %vm103, 1, 0
  %v168 = vsel %vm104, 1, 0
  %v169 = vsel %vm105, 1, 0
  %v170 = vsel %vm106, 1, 0
  %v171 = vsel %vm107, 1, 0
  %v172 = vsel %vm108, 1, 0
  %v173 = vsel %vm109, 1, 0
  %v174 = vsel %vm110, 1, 0
  %v175 = vsel %vm111, 1, 0
  %v176 = vsel %vm112, 1, 0
  %v177 = vsel %vm113, 1, 0
  %v178 = vsel %vm114, 1, 0
  %v179 = vsel %vm115, 1, 0
  %v180 = vsel %vm116, 1, 0
  %v181 = vsel %vm117, 1, 0
  %v182 = vsel %vm118, 1, 0
  %v183 = vsel %vm119, 1, 0
  %v184 = vsel %vm120, 1, 0
  %v185 = vsel %vm121, 1, 0
  %v186 = vsel %vm122, 1, 0
  %v187 = vsel %vm123, 1, 0
  %v188 = vsel %vm124, 1, 0
  %v189 = vsel %vm125, 1, 0
  %v190 = vsel %vm126, 1, 0
  %v191 = vsel %vm127, 1, 0
  %v192 = vsel %vm128, 1, 0
  %v193 = vsel %vm129, 1, 0
  %v194 = vcvt.s32.f32 %v130
  %v195 = vcvt.s32.f32 %v131
  %v196 = vcvt.s32.f32 %v132
  %v197 = vcvt.s32.f32 %v133
  %v198 = vcvt.s32.f32 %v134
  %v199 = vcvt.s32.f32 %v135
  %v200 = vcvt.s32.f32 %v136
  %v201 = vcvt.s32.f32 %v137
  %v202 = vcvt.s32.f32 %v138
  %v203 = vcvt.s32.f32 %v139
  %v204 = vcvt.s32.f32 %v140
  %v205 = vcvt.s32.f32 %v141
  %v206 = vcvt.s32.f32 %v142
  %v207 = vcvt.s32.f32 %v143
  %v208 = vcvt.s32.f32 %v144
  %v209 = vcvt.s32.f32 %v145
  %v210 = vcvt.s32.f32 %v146
  %v211 = vcvt.s32.f32 %v147
  %v212 = vcvt.s32.f32 %v148
  %v213 = vcvt.s32.f32 %v149
  %v214 = vcvt.s32.f32 %v150
  %v215 = vcvt.s32.f32 %v151
  %v216 = vcvt.s32.f32 %v152
  %v217 = vcvt.s32.f32 %v153
  %v218 = vcvt.s32.f32 %v154
  %v219 = vcvt.s32.f32 %v155
  %v220 = vcvt.s32.f32 %v156
  %v221 = vcvt.s32.f32 %v157
  %v222 = vcvt.s32.f32 %v158
  %v223 = vcvt.s32.f32 %v159
  %v224 = vcvt.s32.f32 %v160
  %v225 = vcvt.s32.f32 %v161
  %v226 = vcvt.s32.f32 %v162
  %v227 = vcvt.s32.f32 %v163
  %v228 = vcvt.s32.f32 %v164
  %v229 = vcvt.s32.f32 %v165
  %v230 = vcvt.s32.f32 %v166
  %v231 = vcvt.s32.f32 %v167
  %v232 = vcvt.s32.f32 %v168
  %v233 = vcvt.s32.f32 %v169
  %v234 = vcvt.s32.f32 %v170
  %v235 = vcvt.s32.f32 %v171
  %v236 = vcvt.s32.f32 %v172
  %v237 = vcvt.s32.f32 %v173
  %v238 = vcvt.s32.f32 %v174
  %v239 = vcvt.s32.f32 %v175
  %v240 = vcvt.s32.f32 %v176
  %v241 = vcvt.s32.f32 %v177
  %v242 = vcvt.s32.f32 %v178
  %v243 = vcvt.s32.f32 %v179
  %v244 = vcvt.s32.f32 %v180
  %v245 = vcvt.s32.f32 %v181
  %v246 = vcvt.s32.f32 %v182
  %v247 = vcvt.s32.f32 %v183
  %v248 = vcvt.s32.f32 %v184
  %v249 = vcvt.s32.f32 %v185
  %v250 = vcvt.s32.f32 %v186
  %v251 = vcvt.s32.f32 %v187
  %v252 = vcvt.s32.f32 %v188
  %v253 = vcvt.s32.f32 %v189
  %v254 = vcvt.s32.f32 %v190
  %v255 = vcvt.s32.f32 %v191
  %v256 = vcvt.s32.f32 %v192
  %v257 = vcvt.s32.f32 %v193
  %v258 = vpack.c.bf16 %v198, %v194
  %v259 = vpack.c.bf16 %v199, %v195
  %v260 = vpack.c.bf16 %v200, %v196
  %v261 = vpack.c.bf16 %v201, %v197
  %v262 = vpack.c.bf16 %v206, %v202
  %v263 = vpack.c.bf16 %v207, %v203
  %v264 = vpack.c.bf16 %v208, %v204
  %v265 = vpack.c.bf16 %v209, %v205
  %v266 = vpack.c.bf16 %v214, %v210
  %v267 = vpack.c.bf16 %v215, %v211
  %v268 = vpack.c.bf16 %v216, %v212
  %v269 = vpack.c.bf16 %v217, %v213
  %v270 = vpack.c.bf16 %v222, %v218
  %v271 = vpack.c.bf16 %v223, %v219
  %v272 = vpack.c.bf16 %v224, %v220
  %v273 = vpack.c.bf16 %v225, %v221
  %v274 = vpack.c.bf16 %v230, %v226
  %v275 = vpack.c.bf16 %v231, %v227
  %v276 = vpack.c.bf16 %v232, %v228
  %v277 = vpack.c.bf16 %v233, %v229
  %v278 = vpack.c.bf16 %v238, %v234
  %v279 = vpack.c.bf16 %v239, %v235
  %v280 = vpack.c.bf16 %v240, %v236
  %v281 = vpack.c.bf16 %v241, %v237
  %v282 = vpack.c.bf16 %v246, %v242
  %v283 = vpack.c.bf16 %v247, %v243
  %v284 = vpack.c.bf16 %v248, %v244
  %v285 = vpack.c.bf16 %v249, %v245
  %v286 = vpack.c.bf16 %v254, %v250
  %v287 = vpack.c.bf16 %v255, %v251
  %v288 = vpack.c.bf16 %v256, %v252
  %v289 = vpack.c.bf16 %v257, %v253
  %v290 = vmul.u32 %v29, 128
  %v291 = vadd.s32 %v290, %v46
  %s292 = smul.u32 0, 4
  %s293 = smul.addr %s292, 8
  %s294 = scalar_lea.vmem %s0, %s293
  %v295 = vld [vmem:[%s294] sm:$0xff]
  %v296 = vld [vmem:[%s294 + $0x8] sm:$0xff]
  %v297 = vld [vmem:[%s294 + $0x10] sm:$0xff]
  %v298 = vld [vmem:[%s294 + $0x18] sm:$0xff]
  %s299 = smul.addr %s292, 8
  %s300 = scalar_lea.vmem %s1, %s299
  %v301 = vld [vmem:[%s300] sm:$0xff]
  %v302 = vld [vmem:[%s300 + $0x8] sm:$0xff]
  %v303 = vld [vmem:[%s300 + $0x10] sm:$0xff]
  %v304 = vld [vmem:[%s300 + $0x18] sm:$0xff]
  %v305 = vld [vmem:[%s2] sm:$0xff]
  %s306 = smul.u32 0, 128
  %s307 = sadd.s32 %s15, %s306
  %v308 = vstv %s307
  %v309 = vadd.s32 %v308, %v291
  %vm310 = vcmp.lt.s32.totalorder %v309, 1024
  %vm311 = vcmp.ne.s32.totalorder %v305, 0
  %vm312 = vcmp.ne.s32.totalorder %v305, 4294967295
  %vm313 = vmand %vm311, %vm312
  %vm314 = vmand %vm313, %vm310
  %v315 = vsel %vm314, 1, 0
  %v316 = vcvt.s32.f32 %v315
  %v317 = vpack.c.bf16 %v316, %v316
  %318 = vmatprep.subr.bf16.mxu0 %v259
  %319 = vmatpush1.bf16.msra.mxu0 %v258
  %320 = vmatprep.subr.bf16.mxu0 %v263
  %321 = vmatpush1.bf16.msra.mxu0 %v262
  %322 = vmatprep.subr.bf16.mxu0 %v267
  %323 = vmatpush1.bf16.msra.mxu0 %v266
  %324 = vmatprep.subr.bf16.mxu0 %v271
  %325 = vmatpush1.bf16.msra.mxu0 %v270
  %326 = vmatprep.subr.bf16.mxu0 %v275
  %327 = vmatpush1.bf16.msra.mxu0 %v274
  %328 = vmatprep.subr.bf16.mxu0 %v279
  %329 = vmatpush1.bf16.msra.mxu0 %v278
  %330 = vmatprep.subr.bf16.mxu0 %v283
  %331 = vmatpush1.bf16.msra.mxu0 %v282
  %332 = vmatprep.subr.bf16.mxu0 %v287
  %333 = vmatpush1.bf16.msra.mxu0 %v286
  %334 = vmatprep.subr.bf16.mxu0 0
  %335 = vmatpush1.bf16.msra.mxu0 0
  %336 = vmatprep.subr.bf16.mxu0 0
  %337 = vmatpush1.bf16.msra.mxu0 0
  %338 = vmatprep.subr.bf16.mxu0 0
  %339 = vmatpush1.bf16.msra.mxu0 0
  %340 = vmatprep.subr.bf16.mxu0 0
  %341 = vmatpush1.bf16.msra.mxu0 0
  %342 = vmatprep.subr.bf16.mxu0 0
  %343 = vmatpush1.bf16.msra.mxu0 0
  %344 = vmatprep.subr.bf16.mxu0 0
  %345 = vmatpush1.bf16.msra.mxu0 0
  %346 = vmatprep.subr.bf16.mxu0 0
  %347 = vmatpush1.bf16.msra.mxu0 0
  %348 = vmatprep.subr.bf16.mxu0 0
  %349 = vmatpush1.bf16.msra.mxu0 0
  %350 = vmatprep.mubr.bf16.mxu0 0
  %351 = vmatmul.mubr.bf16.gmra.mrb[0].mxu0 %v317
  %v352 = vpop.f32.mrb[0].mxu0
  %v353 = vadd.f32 0.0, %v352
  %v354 = vpop.f32.mrb[0].mxu0
  %v355 = vadd.f32 0.0, %v354
  %v356 = vpop.f32.mrb[0].mxu0
  %v357 = vpop.f32.mrb[0].mxu0
  %358 = vdwg.mxu0
  %359 = vmatprep.subr.bf16.mxu0 %v261
  %360 = vmatpush1.bf16.msra.mxu0 %v260
  %361 = vmatprep.subr.bf16.mxu0 %v265
  %362 = vmatpush1.bf16.msra.mxu0 %v264
  %363 = vmatprep.subr.bf16.mxu0 %v269
  %364 = vmatpush1.bf16.msra.mxu0 %v268
  %365 = vmatprep.subr.bf16.mxu0 %v273
  %366 = vmatpush1.bf16.msra.mxu0 %v272
  %367 = vmatprep.subr.bf16.mxu0 %v277
  %368 = vmatpush1.bf16.msra.mxu0 %v276
  %369 = vmatprep.subr.bf16.mxu0 %v281
  %370 = vmatpush1.bf16.msra.mxu0 %v280
  %371 = vmatprep.subr.bf16.mxu0 %v285
  %372 = vmatpush1.bf16.msra.mxu0 %v284
  %373 = vmatprep.subr.bf16.mxu0 %v289
  %374 = vmatpush1.bf16.msra.mxu0 %v288
  %375 = vmatprep.subr.bf16.mxu0 0
  %376 = vmatpush1.bf16.msra.mxu0 0
  %377 = vmatprep.subr.bf16.mxu0 0
  %378 = vmatpush1.bf16.msra.mxu0 0
  %379 = vmatprep.subr.bf16.mxu0 0
  %380 = vmatpush1.bf16.msra.mxu0 0
  %381 = vmatprep.subr.bf16.mxu0 0
  %382 = vmatpush1.bf16.msra.mxu0 0
  %383 = vmatprep.subr.bf16.mxu0 0
  %384 = vmatpush1.bf16.msra.mxu0 0
  %385 = vmatprep.subr.bf16.mxu0 0
  %386 = vmatpush1.bf16.msra.mxu0 0
  %387 = vmatprep.subr.bf16.mxu0 0
  %388 = vmatpush1.bf16.msra.mxu0 0
  %389 = vmatprep.subr.bf16.mxu0 0
  %390 = vmatpush1.bf16.msra.mxu0 0
  %391 = vmatprep.mubr.bf16.mxu0 0
  %392 = vmatmul.mubr.bf16.gmra.mrb[0].mxu0 %v317
  %v393 = vpop.f32.mrb[0].mxu0
  %v394 = vadd.f32 0.0, %v393
  %v395 = vpop.f32.mrb[0].mxu0
  %v396 = vadd.f32 0.0, %v395
  %v397 = vpop.f32.mrb[0].mxu0
  %v398 = vpop.f32.mrb[0].mxu0
  %399 = vdwg.mxu0
  %400 = vrot.lane.b32.xlu0 %v295, 127
  %v401 = vpop.permute.xlu0 %400
  %402 = vrot.lane.b32.xlu0 %v296, 127
  %v403 = vpop.permute.xlu0 %402
  %404 = vrot.lane.b32.xlu0 %v297, 127
  %v405 = vpop.permute.xlu0 %404
  %406 = vrot.lane.b32.xlu0 %v298, 127
  %v407 = vpop.permute.xlu0 %406
  %vm408 = vcmp.lt.s32.totalorder %v46, 127
  %v409 = vsel %vm408, %v405, %v407
  %v410 = vsel %vm408, %v403, %v405
  %v411 = vsel %vm408, %v401, %v403
  %v412 = vsel %vm408, %v407, %v401
  %413 = vrot.lane.b32.xlu0 %v295, 126
  %v414 = vpop.permute.xlu0 %413
  %415 = vrot.lane.b32.xlu0 %v296, 126
  %v416 = vpop.permute.xlu0 %415
  %417 = vrot.lane.b32.xlu0 %v297, 126
  %v418 = vpop.permute.xlu0 %417
  %419 = vrot.lane.b32.xlu0 %v298, 126
  %v420 = vpop.permute.xlu0 %419
  %vm421 = vcmp.lt.s32.totalorder %v46, 126
  %v422 = vsel %vm421, %v418, %v420
  %v423 = vsel %vm421, %v416, %v418
  %v424 = vsel %vm421, %v414, %v416
  %v425 = vsel %vm421, %v420, %v414
  %426 = vrot.lane.b32.xlu0 %v295, 125
  %v427 = vpop.permute.xlu0 %426
  %428 = vrot.lane.b32.xlu0 %v296, 125
  %v429 = vpop.permute.xlu0 %428
  %430 = vrot.lane.b32.xlu0 %v297, 125
  %v431 = vpop.permute.xlu0 %430
  %432 = vrot.lane.b32.xlu0 %v298, 125
  %v433 = vpop.permute.xlu0 %432
  %vm434 = vcmp.lt.s32.totalorder %v46, 125
  %v435 = vsel %vm434, %v431, %v433
  %v436 = vsel %vm434, %v429, %v431
  %v437 = vsel %vm434, %v427, %v429
  %v438 = vsel %vm434, %v433, %v427
  %439 = vrot.lane.b32.xlu0 %v301, 127
  %v440 = vpop.permute.xlu0 %439
  %441 = vrot.lane.b32.xlu0 %v302, 127
  %v442 = vpop.permute.xlu0 %441
  %443 = vrot.lane.b32.xlu0 %v303, 127
  %v444 = vpop.permute.xlu0 %443
  %445 = vrot.lane.b32.xlu0 %v304, 127
  %v446 = vpop.permute.xlu0 %445
  %v447 = vsel %vm408, %v444, %v446
  %v448 = vsel %vm408, %v442, %v444
  %v449 = vsel %vm408, %v440, %v442
  %v450 = vsel %vm408, %v446, %v440
  %451 = vrot.lane.b32.xlu0 %v301, 126
  %v452 = vpop.permute.xlu0 %451
  %453 = vrot.lane.b32.xlu0 %v302, 126
  %v454 = vpop.permute.xlu0 %453
  %455 = vrot.lane.b32.xlu0 %v303, 126
  %v456 = vpop.permute.xlu0 %455
  %457 = vrot.lane.b32.xlu0 %v304, 126
  %v458 = vpop.permute.xlu0 %457
  %v459 = vsel %vm421, %v456, %v458
  %v460 = vsel %vm421, %v454, %v456
  %v461 = vsel %vm421, %v452, %v454
  %v462 = vsel %vm421, %v458, %v452
  %463 = vrot.lane.b32.xlu0 %v301, 125
  %v464 = vpop.permute.xlu0 %463
  %465 = vrot.lane.b32.xlu0 %v302, 125
  %v466 = vpop.permute.xlu0 %465
  %467 = vrot.lane.b32.xlu0 %v303, 125
  %v468 = vpop.permute.xlu0 %467
  %469 = vrot.lane.b32.xlu0 %v304, 125
  %v470 = vpop.permute.xlu0 %469
  %v471 = vsel %vm434, %v468, %v470
  %v472 = vsel %vm434, %v466, %v468
  %v473 = vsel %vm434, %v464, %v466
  %v474 = vsel %vm434, %v470, %v464
  %v475 = vand.u32 2147483647, %v461
  %v476 = vand.u32 2147483647, %v460
  %v477 = vand.u32 2147483647, %v459
  %v478 = vand.u32 2147483647, %v462
  %v479 = vand.u32 2147483647, %v473
  %v480 = vand.u32 2147483647, %v472
  %v481 = vand.u32 2147483647, %v471
  %v482 = vand.u32 2147483647, %v474
  %v483 = vmul.f32 %v475, %v479
  %v484 = vmul.f32 %v476, %v480
  %v485 = vmul.f32 %v477, %v481
  %v486 = vmul.f32 %v478, %v482
  %v487 = vsub.f32 %v424, %v295
  %v488 = vsub.f32 %v423, %v296
  %v489 = vsub.f32 %v422, %v297
  %v490 = vsub.f32 %v425, %v298
  %v491 = vadd.f32 %v487, 1.0
  %v492 = vadd.f32 %v488, 1.0
  %v493 = vadd.f32 %v489, 1.0
  %v494 = vadd.f32 %v490, 1.0
  %v495 = vand.u32 2147483647, %v491
  %v496 = vand.u32 2147483647, %v492
  %v497 = vand.u32 2147483647, %v493
  %v498 = vand.u32 2147483647, %v494
  %v499 = vsub.f32 %v437, %v411
  %v500 = vsub.f32 %v436, %v410
  %v501 = vsub.f32 %v435, %v409
  %v502 = vsub.f32 %v438, %v412
  %v503 = vadd.f32 %v499, 1.0
  %v504 = vadd.f32 %v500, 1.0
  %v505 = vadd.f32 %v501, 1.0
  %v506 = vadd.f32 %v502, 1.0
  %v507 = vand.u32 2147483647, %v503
  %v508 = vand.u32 2147483647, %v504
  %v509 = vand.u32 2147483647, %v505
  %v510 = vand.u32 2147483647, %v506
  %v511 = vmul.f32 %v495, %v507
  %v512 = vmul.f32 %v496, %v508
  %v513 = vmul.f32 %v497, %v509
  %v514 = vmul.f32 %v498, %v510
  %v515 = vadd.f32 %v461, %v301
  %v516 = vadd.f32 %v460, %v302
  %v517 = vadd.f32 %v459, %v303
  %v518 = vadd.f32 %v462, %v304
  %v519 = vmin.f32 %v424, %v515
  %v520 = vmin.f32 %v423, %v516
  %v521 = vmin.f32 %v422, %v517
  %v522 = vmin.f32 %v425, %v518
  %v523 = vmax.f32 %v295, %v301
  %v524 = vmax.f32 %v296, %v302
  %v525 = vmax.f32 %v297, %v303
  %v526 = vmax.f32 %v298, %v304
  %v527 = vsub.f32 %v519, %v523
  %v528 = vsub.f32 %v520, %v524
  %v529 = vsub.f32 %v521, %v525
  %v530 = vsub.f32 %v522, %v526
  %v531 = vadd.f32 %v527, 1.0
  %v532 = vadd.f32 %v528, 1.0
  %v533 = vadd.f32 %v529, 1.0
  %v534 = vadd.f32 %v530, 1.0
  %v535 = vadd.f32 %v473, %v449
  %v536 = vadd.f32 %v472, %v448
  %v537 = vadd.f32 %v471, %v447
  %v538 = vadd.f32 %v474, %v450
  %v539 = vmin.f32 %v437, %v535
  %v540 = vmin.f32 %v436, %v536
  %v541 = vmin.f32 %v435, %v537
  %v542 = vmin.f32 %v438, %v538
  %v543 = vmax.f32 %v411, %v449
  %v544 = vmax.f32 %v410, %v448
  %v545 = vmax.f32 %v409, %v447
  %v546 = vmax.f32 %v412, %v450
  %v547 = vsub.f32 %v539, %v543
  %v548 = vsub.f32 %v540, %v544
  %v549 = vsub.f32 %v541, %v545
  %v550 = vsub.f32 %v542, %v546
  %v551 = vadd.f32 %v547, 1.0
  %v552 = vadd.f32 %v548, 1.0
  %v553 = vadd.f32 %v549, 1.0
  %v554 = vadd.f32 %v550, 1.0
  %v555 = vmax.f32 %v531, 0.0
  %v556 = vmax.f32 %v532, 0.0
  %v557 = vmax.f32 %v533, 0.0
  %v558 = vmax.f32 %v534, 0.0
  %v559 = vmax.f32 %v551, 0.0
  %v560 = vmax.f32 %v552, 0.0
  %v561 = vmax.f32 %v553, 0.0
  %v562 = vmax.f32 %v554, 0.0
  %v563 = vmul.f32 %v555, %v559
  %v564 = vmul.f32 %v556, %v560
  %v565 = vmul.f32 %v557, %v561
  %v566 = vmul.f32 %v558, %v562
  %v567 = vadd.f32 %v483, %v511
  %v568 = vadd.f32 %v484, %v512
  %v569 = vadd.f32 %v485, %v513
  %v570 = vadd.f32 %v486, %v514
  %v571 = vsub.f32 %v567, %v563
  %v572 = vsub.f32 %v568, %v564
  %v573 = vsub.f32 %v569, %v565
  %v574 = vsub.f32 %v570, %v566
  %vm575 = vcmp.gt.f32.partialorder %v353, 0.5
  %vm576 = vcmp.gt.f32.partialorder %v355, 0.5
  %vm577 = vcmp.gt.f32.partialorder %v394, 0.5
  %vm578 = vcmp.gt.f32.partialorder %v396, 0.5
  %v579 = vsel %vm575, %v563, 0.0
  %v580 = vsel %vm576, %v564, 0.0
  %v581 = vsel %vm577, %v565, 0.0
  %v582 = vsel %vm578, %v566, 0.0
  %v583 = vsel %vm575, %v571, 1.0
  %v584 = vsel %vm576, %v572, 1.0
  %v585 = vsel %vm577, %v573, 1.0
  %v586 = vsel %vm578, %v574, 1.0
  %v587 = vrcp.pop %v583
  %v588 = vmul.f32 %v579, %v587
  %v589 = vrcp.pop %v584
  %v590 = vmul.f32 %v580, %v589
  %v591 = vrcp.pop %v585
  %v592 = vmul.f32 %v581, %v591
  %v593 = vrcp.pop %v586
  %v594 = vmul.f32 %v582, %v593
  %v595 = vmax.f32 %v588, 0.0
  %v596 = vmax.f32 %v590, 0.0
  %v597 = vmax.f32 %v592, 0.0
  %v598 = vmax.f32 %v594, 0.0
  %v599 = vmax.f32 %v595, 1.1754944e-38
  %v600 = vmax.f32 %v596, 1.1754944e-38
  %v601 = vmax.f32 %v597, 1.1754944e-38
  %v602 = vmax.f32 %v598, 1.1754944e-38
  %v603 = vlog2.pop %v599
  %v604 = vmul.f32 %v603, 0.6931472
  %v605 = vlog2.pop %v600
  %v606 = vmul.f32 %v605, 0.6931472
  %v607 = vlog2.pop %v601
  %v608 = vmul.f32 %v607, 0.6931472
  %v609 = vlog2.pop %v602
  %v610 = vmul.f32 %v609, 0.6931472
  %v611 = vsub.f32 0.0, %v604
  %v612 = vsub.f32 0.0, %v606
  %v613 = vsub.f32 0.0, %v608
  %v614 = vsub.f32 0.0, %v610
  %v615 = vld [vmem:[%s3] sm:$0xff]
  %v616 = vld [vmem:[%s3 + $0x8] sm:$0xff]
  %v617 = vld [vmem:[%s3 + $0x10] sm:$0xff]
  %v618 = vld [vmem:[%s3 + $0x18] sm:$0xff]
  %v619 = vmul.f32 %v611, %v353
  %v620 = vmul.f32 %v612, %v355
  %v621 = vmul.f32 %v613, %v394
  %v622 = vmul.f32 %v614, %v396
  %v623 = vadd.f32 %v619, 0.0
  %v624 = vadd.f32 %v620, 0.0
  %v625 = vadd.f32 %v621, 0.0
  %v626 = vadd.f32 %v622, 0.0
  %v627 = vadd.f32 %v615, %v623
  %v628 = vadd.f32 %v616, %v624
  %v629 = vadd.f32 %v617, %v625
  %v630 = vadd.f32 %v618, %v626
  %631 = vst [vmem:[%s3] sm:$0xff] %v627
  %632 = vst [vmem:[%s3 + $0x8] sm:$0xff] %v628
  %633 = vst [vmem:[%s3 + $0x10] sm:$0xff] %v629
  %634 = vst [vmem:[%s3 + $0x18] sm:$0xff] %v630
  %s635 = scalar_lea.vmem %s3, 32
  %v636 = vld [vmem:[%s635] sm:$0xff]
  %v637 = vld [vmem:[%s635 + $0x8] sm:$0xff]
  %v638 = vld [vmem:[%s635 + $0x10] sm:$0xff]
  %v639 = vld [vmem:[%s635 + $0x18] sm:$0xff]
  %v640 = vmul.f32 %v595, %v353
  %v641 = vmul.f32 %v596, %v355
  %v642 = vmul.f32 %v597, %v394
  %v643 = vmul.f32 %v598, %v396
  %v644 = vadd.f32 %v640, 0.0
  %v645 = vadd.f32 %v641, 0.0
  %v646 = vadd.f32 %v642, 0.0
  %v647 = vadd.f32 %v643, 0.0
  %v648 = vadd.f32 %v636, %v644
  %v649 = vadd.f32 %v637, %v645
  %v650 = vadd.f32 %v638, %v646
  %v651 = vadd.f32 %v639, %v647
  %652 = vst [vmem:[%s635] sm:$0xff] %v648
  %653 = vst [vmem:[%s635 + $0x8] sm:$0xff] %v649
  %654 = vst [vmem:[%s635 + $0x10] sm:$0xff] %v650
  %655 = vst [vmem:[%s635 + $0x18] sm:$0xff] %v651
  %s656 = scalar_lea.vmem %s3, 64
  %v657 = vld [vmem:[%s656] sm:$0xff]
  %v658 = vld [vmem:[%s656 + $0x8] sm:$0xff]
  %v659 = vld [vmem:[%s656 + $0x10] sm:$0xff]
  %v660 = vld [vmem:[%s656 + $0x18] sm:$0xff]
  %v661 = vadd.f32 %v353, 0.0
  %v662 = vadd.f32 %v355, 0.0
  %v663 = vadd.f32 %v394, 0.0
  %v664 = vadd.f32 %v396, 0.0
  %v665 = vadd.f32 %v657, %v661
  %v666 = vadd.f32 %v658, %v662
  %v667 = vadd.f32 %v659, %v663
  %v668 = vadd.f32 %v660, %v664
  %669 = vst [vmem:[%s656] sm:$0xff] %v665
  %670 = vst [vmem:[%s656 + $0x8] sm:$0xff] %v666
  %671 = vst [vmem:[%s656 + $0x10] sm:$0xff] %v667
  %672 = vst [vmem:[%s656 + $0x18] sm:$0xff] %v668
  // Predicated region
  $region14: #{iou_loss.1} parent=0 // pred_check
    _
  $region15: #{iou_loss.1} parent=0 // pred_check_branch
    %674 = sbr.rel (0) target = $region17
  $region16: #{iou_loss.1} parent=0 // pred_region
    _
  $region17: #{iou_loss.1} parent=0 // pred_fallthru
    _
  // Predicated region
  $region18: #{iou_loss.1} parent=0 // pred_check
    _
  $region19: #{iou_loss.1} parent=0 // pred_check_branch
    %676 = sbr.rel (0) target = $region21
  $region20: #{iou_loss.1} parent=0 // pred_region
    _
  $region21: #{iou_loss.1} parent=0 // pred_fallthru
    _

</llo_original>
